<compile_context>
chip_gen: v5e
topology: v5e:2x2
jax: 0.10.0
libtpu: 0.0.40
codegen_flags: <defaults>
</compile_context>

<pallas_src>
import math
import jax
import jax.numpy as jnp
from jax import lax
from jax.experimental import pallas as pl
from jax.experimental.pallas import tpu as pltpu


# Contract dim 1 of both operands: x @ W.T without transposing W in-kernel.
_DN_RHS_T = (((1,), (1,)), ((), ()))


# ---------------------------------------------------------------------------
# Kernels
# ---------------------------------------------------------------------------
def _noisy_linear_train_kernel(x_ref, eps_in_ref, wmu_ref, wsig_ref, eps_out_ref,
                               bmu_ref, bsig_ref, beps_ref, o_ref, acc_ref):
    k = pl.program_id(2)

    @pl.when(k == 0)
    def _():
        acc_ref[...] = jnp.zeros_like(acc_ref)

    x = x_ref[...]                                               # (TM, TK)

    # mu path: x @ weight_mu.T  (RHS fed transposed natively into the MXU)
    part = lax.dot_general(x, wmu_ref[...], _DN_RHS_T,
                           preferred_element_type=jnp.float32)

    # noise path, factored:  ((x * eps_in) @ weight_sigma.T) * eps_out
    #   == x @ (weight_sigma * outer(eps_out, eps_in)).T
    # -> the full (out, in) weight_epsilon matrix never touches HBM or VMEM.
    xs = x * eps_in_ref[...]                                     # (TM,TK) * (1,TK)
    part += lax.dot_general(xs, wsig_ref[...], _DN_RHS_T,
                            preferred_element_type=jnp.float32) * eps_out_ref[...]

    acc_ref[...] += part

    @pl.when(k == pl.num_programs(2) - 1)
    def _():
        bias = bmu_ref[...] + bsig_ref[...] * beps_ref[...]      # (1, TN)
        o_ref[...] = (acc_ref[...] + bias).astype(o_ref.dtype)


def _noisy_linear_eval_kernel(x_ref, wmu_ref, bmu_ref, o_ref, acc_ref):
    k = pl.program_id(2)

    @pl.when(k == 0)
    def _():
        acc_ref[...] = jnp.zeros_like(acc_ref)

    acc_ref[...] += lax.dot_general(x_ref[...], wmu_ref[...], _DN_RHS_T,
                                    preferred_element_type=jnp.float32)

    @pl.when(k == pl.num_programs(2) - 1)
    def _():
        o_ref[...] = (acc_ref[...] + bmu_ref[...]).astype(o_ref.dtype)


# ---------------------------------------------------------------------------
# Wrapper
# ---------------------------------------------------------------------------
def _round_up(x, m):
    return ((x + m - 1) // m) * m


def _choose_tile(dim, cap, align):
    """Largest tile <= cap dividing `dim` (dim is already a multiple of align)."""
    if dim <= cap:
        return dim
    for t in range(cap, align - 1, -align):
        if dim % t == 0:
            return t
    return align


def noisy_linear_forward(x, params, training=True):
    """NoisyLinear forward.  x: (..., in_features) f32 -> (..., out_features)."""
    orig_shape = x.shape
    in_features = orig_shape[-1]
    out_features = params["weight_mu"].shape[0]
    x2 = x.reshape(-1, in_features).astype(jnp.float32)
    B = x2.shape[0]

    # ---- padded, (8,128)-aligned, lane-dense geometry ----------------------
    Bp = _round_up(B, 8)
    INp = _round_up(in_features, 128)
    OUTp = _round_up(out_features, 128)
    TM = _choose_tile(Bp, 256, 8)
    TK = _choose_tile(INp, 512, 128)
    TN = _choose_tile(OUTp, 256, 128)
    grid = (Bp // TM, OUTp // TN, INp // TK)

    def pad2(a, rows, cols):
        return jnp.pad(a, ((0, rows - a.shape[0]), (0, cols - a.shape[1])))

    def pad_row(v, cols):
        return jnp.pad(v, (0, cols - v.shape[0]))[None, :]

    xp = pad2(x2, Bp, INp)
    wmu = pad2(params["weight_mu"].astype(jnp.float32), OUTp, INp)
    bmu = pad_row(params["bias_mu"].astype(jnp.float32), OUTp)

    x_spec = pl.BlockSpec((TM, TK), lambda i, j, k: (i, k))
    w_spec = pl.BlockSpec((TN, TK), lambda i, j, k: (j, k))
    rowN_spec = pl.BlockSpec((1, TN), lambda i, j, k: (0, j))
    rowK_spec = pl.BlockSpec((1, TK), lambda i, j, k: (0, k))
    out_spec = pl.BlockSpec((TM, TN), lambda i, j, k: (i, j))

    if training:
        wsig = pad2(params["weight_sigma"].astype(jnp.float32), OUTp, INp)
        eps_in = pad_row(params["weight_eps_in"].astype(jnp.float32), INp)
        eps_out = pad_row(params["weight_eps_out"].astype(jnp.float32), OUTp)
        bsig = pad_row(params["bias_sigma"].astype(jnp.float32), OUTp)
        beps = pad_row(params["bias_epsilon"].astype(jnp.float32), OUTp)
        args = (xp, eps_in, wmu, wsig, eps_out, bmu, bsig, beps)
        in_specs = [x_spec, rowK_spec, w_spec, w_spec, rowN_spec,
                    rowN_spec, rowN_spec, rowN_spec]
        kernel = _noisy_linear_train_kernel
    else:
        args = (xp, wmu, bmu)
        in_specs = [x_spec, w_spec, rowN_spec]
        kernel = _noisy_linear_eval_kernel

    out = pl.pallas_call(
        kernel,
        out_shape=jax.ShapeDtypeStruct((Bp, OUTp), jnp.float32),
        grid_spec=pltpu.PrefetchScalarGridSpec(
            num_scalar_prefetch=0,
            grid=grid,
            in_specs=in_specs,
            out_specs=out_spec,
            scratch_shapes=[pltpu.VMEM((TM, TN), jnp.float32)]),
        compiler_params=pltpu.CompilerParams(
            dimension_semantics=("parallel", "parallel", "arbitrary")),
    )(*args)

    out = out[:B, :out_features]
    return out.reshape(orig_shape[:-1] + (out_features,))


# ---------------------------------------------------------------------------
# Deterministic parameter init mirroring NoisyLinear.__init__ /
# reset_parameters() / reset_noise()
# ---------------------------------------------------------------------------
def _scale_noise(key, size):
    x = jax.random.normal(key, (size,), dtype=jnp.float32)
    return jnp.sign(x) * jnp.sqrt(jnp.abs(x))


def init_noisy_linear(key, in_features, out_features, std_init=0.4):
    k_wmu, k_bmu, k_eps_in, k_eps_out, k_eps_b = jax.random.split(key, 5)
    mu_range = 1.0 / math.sqrt(in_features)

    weight_mu = jax.random.uniform(
        k_wmu, (out_features, in_features), jnp.float32, -mu_range, mu_range)
    weight_sigma = jnp.full((out_features, in_features),
                            std_init / math.sqrt(in_features), jnp.float32)
    bias_mu = jax.random.uniform(
        k_bmu, (out_features,), jnp.float32, -mu_range, mu_range)
    bias_sigma = jnp.full((out_features,),
                          std_init / math.sqrt(out_features), jnp.float32)

    eps_in = _scale_noise(k_eps_in, in_features)     # factored noise (kernel uses these)
    eps_out = _scale_noise(k_eps_out, out_features)
    bias_epsilon = _scale_noise(k_eps_b, out_features)

    return {
        "weight_mu": weight_mu,
        "weight_sigma": weight_sigma,
        "weight_eps_in": eps_in,
        "weight_eps_out": eps_out,
        # full outer product kept only for the plain-JAX reference check
        # (mirrors the PyTorch weight_epsilon buffer = eps_out.ger(eps_in)).
        "weight_epsilon": jnp.outer(eps_out, eps_in),
        "bias_mu": bias_mu,
        "bias_sigma": bias_sigma,
        "bias_epsilon": bias_epsilon,
    }


# ---------------------------------------------------------------------------
if __name__ == "__main__":
    key = jax.random.PRNGKey(0)

    # Two configs: one tiny (single grid point), one exercising padding and a
    # multi-tile (M=1, N=3, K=5) grid with the K-axis accumulator.
    for (batch, in_features, out_features) in [(8, 32, 16), (20, 640, 272)]:
        k_param, k_x, key = jax.random.split(key, 3)
        params = init_noisy_linear(k_param, in_features, out_features, std_init=0.4)
        x = jax.random.normal(k_x, (batch, in_features), dtype=jnp.float32)

        y_train = jax.block_until_ready(noisy_linear_forward(x, params, training=True))
        y_eval = jax.block_until_ready(noisy_linear_forward(x, params, training=False))

        # reference check in plain JAX (uses the full weight_epsilon matrix,
        # exactly like the PyTorch module)
        w_t = params["weight_mu"] + params["weight_sigma"] * params["weight_epsilon"]
        b_t = params["bias_mu"] + params["bias_sigma"] * params["bias_epsilon"]
        ref_train = x @ w_t.T + b_t
        ref_eval = x @ params["weight_mu"].T + params["bias_mu"]

        assert y_train.shape == (batch, out_features)
        assert y_eval.shape == (batch, out_features)
        assert jnp.allclose(y_train, ref_train, atol=1e-4, rtol=1e-4), \
            float(jnp.max(jnp.abs(y_train - ref_train)))
        assert jnp.allclose(y_eval, ref_eval, atol=1e-4, rtol=1e-4), \
            float(jnp.max(jnp.abs(y_eval - ref_eval)))

    # TODO(synk): PyTorch's torch.randn noise stream (reset_noise) is not bit-reproduced;
    # noise is generated with jax.random host-side, which matches the math but not the RNG.
    print("KERNEL_OK")
</pallas_src>

<mosaic_0001>
module attributes {stable_mosaic.version = 11 : i64} {
  func.func @_noisy_linear_train_kernel(%arg0: i32, %arg1: i32, %arg2: i32, %arg3: memref<8x128xf32, #tpu.memory_space<vmem>>, %arg4: memref<1x128xf32, #tpu.memory_space<vmem>>, %arg5: memref<128x128xf32, #tpu.memory_space<vmem>>, %arg6: memref<128x128xf32, #tpu.memory_space<vmem>>, %arg7: memref<1x128xf32, #tpu.memory_space<vmem>>, %arg8: memref<1x128xf32, #tpu.memory_space<vmem>>, %arg9: memref<1x128xf32, #tpu.memory_space<vmem>>, %arg10: memref<1x128xf32, #tpu.memory_space<vmem>>, %arg11: memref<8x128xf32, #tpu.memory_space<vmem>>, %arg12: memref<8x128xf32, #tpu.memory_space<vmem>>) attributes {dimension_semantics = [#tpu.dimension_semantics<parallel>, #tpu.dimension_semantics<parallel>, #tpu.dimension_semantics<arbitrary>], iteration_bounds = array<i64: 1, 1, 1>, scalar_prefetch = 0 : i64, scratch_operands = 1 : i64, tpu.core_type = #tpu.core_type<tc>, window_params = [{transform_indices = @transform_0, window_bounds = array<i64: 8, 128>}, {transform_indices = @transform_1, window_bounds = array<i64: 1, 128>}, {transform_indices = @transform_2, window_bounds = array<i64: 128, 128>}, {transform_indices = @transform_3, window_bounds = array<i64: 128, 128>}, {transform_indices = @transform_4, window_bounds = array<i64: 1, 128>}, {transform_indices = @transform_5, window_bounds = array<i64: 1, 128>}, {transform_indices = @transform_6, window_bounds = array<i64: 1, 128>}, {transform_indices = @transform_7, window_bounds = array<i64: 1, 128>}, {transform_indices = @transform_8, window_bounds = array<i64: 8, 128>}]} {
    %c0_i32 = arith.constant 0 : i32
    %0 = arith.cmpi eq, %arg2, %c0_i32 : i32
    %1 = arith.extui %0 : i1 to i32
    %c0_i32_0 = arith.constant 0 : i32
    %2 = arith.cmpi ne, %1, %c0_i32_0 : i32
    scf.if %2 {
      %cst_17 = arith.constant 0.000000e+00 : f32
      %21 = vector.broadcast %cst_17 : f32 to vector<8x128xf32>
      %c0_18 = arith.constant 0 : index
      %c0_19 = arith.constant 0 : index
      %22 = vector.load %arg12[%c0_18, %c0_19] : memref<8x128xf32, #tpu.memory_space<vmem>>, vector<8x128xf32>
      tpu.vector_store %arg12[%c0_18, %c0_19], %21 {strides = array<i32>} : memref<8x128xf32, #tpu.memory_space<vmem>>, vector<8x128xf32>,
    } else {
    }
    %c0 = arith.constant 0 : index
    %c0_1 = arith.constant 0 : index
    %3 = vector.load %arg3[%c0, %c0_1] : memref<8x128xf32, #tpu.memory_space<vmem>>, vector<8x128xf32>
    %c0_2 = arith.constant 0 : index
    %c0_3 = arith.constant 0 : index
    %4 = vector.load %arg5[%c0_2, %c0_3] : memref<128x128xf32, #tpu.memory_space<vmem>>, vector<128x128xf32>
    %cst = arith.constant dense<0.000000e+00> : vector<8x128xf32>
    %5 = tpu.matmul %3, %4, %cst {dimension_numbers = #tpu.dot_dimension_numbers<[1], [1], [0], [0], [0, 0, 1, 0], [], []>} : vector<8x128xf32>, vector<128x128xf32>, vector<8x128xf32> -> vector<8x128xf32>
    %c0_4 = arith.constant 0 : index
    %c0_5 = arith.constant 0 : index
    %6 = vector.load %arg4[%c0_4, %c0_5] : memref<1x128xf32, #tpu.memory_space<vmem>>, vector<1x128xf32>
    %7 = vector.broadcast %6 : vector<1x128xf32> to vector<8x128xf32>
    %8 = arith.mulf %3, %7 : vector<8x128xf32>
    %c0_6 = arith.constant 0 : index
    %c0_7 = arith.constant 0 : index
    %9 = vector.load %arg6[%c0_6, %c0_7] : memref<128x128xf32, #tpu.memory_space<vmem>>, vector<128x128xf32>
    %cst_8 = arith.constant dense<0.000000e+00> : vector<8x128xf32>
    %10 = tpu.matmul %8, %9, %cst_8 {dimension_numbers = #tpu.dot_dimension_numbers<[1], [1], [0], [0], [0, 0, 1, 0], [], []>} : vector<8x128xf32>, vector<128x128xf32>, vector<8x128xf32> -> vector<8x128xf32>
    %c0_9 = arith.constant 0 : index
    %c0_10 = arith.constant 0 : index
    %11 = vector.load %arg7[%c0_9, %c0_10] : memref<1x128xf32, #tpu.memory_space<vmem>>, vector<1x128xf32>
    %12 = vector.broadcast %11 : vector<1x128xf32> to vector<8x128xf32>
    %13 = arith.mulf %10, %12 : vector<8x128xf32>
    %14 = arith.addf %5, %13 : vector<8x128xf32>
    %c0_11 = arith.constant 0 : index
    %c0_12 = arith.constant 0 : index
    %15 = vector.load %arg12[%c0_11, %c0_12] : memref<8x128xf32, #tpu.memory_space<vmem>>, vector<8x128xf32>
    %16 = arith.addf %15, %14 : vector<8x128xf32>
    %c0_13 = arith.constant 0 : index
    %c0_14 = arith.constant 0 : index
    %17 = vector.load %arg12[%c0_13, %c0_14] : memref<8x128xf32, #tpu.memory_space<vmem>>, vector<8x128xf32>
    tpu.vector_store %arg12[%c0_13, %c0_14], %16 {strides = array<i32>} : memref<8x128xf32, #tpu.memory_space<vmem>>, vector<8x128xf32>,
    %c0_i32_15 = arith.constant 0 : i32
    %18 = arith.cmpi eq, %arg2, %c0_i32_15 : i32
    %19 = arith.extui %18 : i1 to i32
    %c0_i32_16 = arith.constant 0 : i32
    %20 = arith.cmpi ne, %19, %c0_i32_16 : i32
    scf.if %20 {
      %c0_17 = arith.constant 0 : index
      %c0_18 = arith.constant 0 : index
      %21 = vector.load %arg8[%c0_17, %c0_18] : memref<1x128xf32, #tpu.memory_space<vmem>>, vector<1x128xf32>
      %c0_19 = arith.constant 0 : index
      %c0_20 = arith.constant 0 : index
      %22 = vector.load %arg9[%c0_19, %c0_20] : memref<1x128xf32, #tpu.memory_space<vmem>>, vector<1x128xf32>
      %c0_21 = arith.constant 0 : index
      %c0_22 = arith.constant 0 : index
      %23 = vector.load %arg10[%c0_21, %c0_22] : memref<1x128xf32, #tpu.memory_space<vmem>>, vector<1x128xf32>
      %24 = arith.mulf %22, %23 : vector<1x128xf32>
      %25 = arith.addf %21, %24 : vector<1x128xf32>
      %c0_23 = arith.constant 0 : index
      %c0_24 = arith.constant 0 : index
      %26 = vector.load %arg12[%c0_23, %c0_24] : memref<8x128xf32, #tpu.memory_space<vmem>>, vector<8x128xf32>
      %27 = vector.broadcast %25 : vector<1x128xf32> to vector<8x128xf32>
      %28 = arith.addf %26, %27 : vector<8x128xf32>
      %c0_25 = arith.constant 0 : index
      %c0_26 = arith.constant 0 : index
      %29 = vector.load %arg11[%c0_25, %c0_26] : memref<8x128xf32, #tpu.memory_space<vmem>>, vector<8x128xf32>
      tpu.vector_store %arg11[%c0_25, %c0_26], %28 {strides = array<i32>} : memref<8x128xf32, #tpu.memory_space<vmem>>, vector<8x128xf32>,
    } else {
    }
    return
  }
  func.func @transform_0(%arg0: i32, %arg1: i32, %arg2: i32) -> (i32, i32) {
    %c0_i32 = arith.constant 0 : i32
    return %arg0, %arg2 : i32, i32
  }
  func.func @transform_1(%arg0: i32, %arg1: i32, %arg2: i32) -> (i32, i32) {
    %c0_i32 = arith.constant 0 : i32
    %c0_i32_0 = arith.constant 0 : i32
    return %c0_i32, %arg2 : i32, i32
  }
  func.func @transform_2(%arg0: i32, %arg1: i32, %arg2: i32) -> (i32, i32) {
    %c0_i32 = arith.constant 0 : i32
    return %arg1, %arg2 : i32, i32
  }
  func.func @transform_3(%arg0: i32, %arg1: i32, %arg2: i32) -> (i32, i32) {
    %c0_i32 = arith.constant 0 : i32
    return %arg1, %arg2 : i32, i32
  }
  func.func @transform_4(%arg0: i32, %arg1: i32, %arg2: i32) -> (i32, i32) {
    %c0_i32 = arith.constant 0 : i32
    %c0_i32_0 = arith.constant 0 : i32
    return %c0_i32, %arg1 : i32, i32
  }
  func.func @transform_5(%arg0: i32, %arg1: i32, %arg2: i32) -> (i32, i32) {
    %c0_i32 = arith.constant 0 : i32
    %c0_i32_0 = arith.constant 0 : i32
    return %c0_i32, %arg1 : i32, i32
  }
  func.func @transform_6(%arg0: i32, %arg1: i32, %arg2: i32) -> (i32, i32) {
    %c0_i32 = arith.constant 0 : i32
    %c0_i32_0 = arith.constant 0 : i32
    return %c0_i32, %arg1 : i32, i32
  }
  func.func @transform_7(%arg0: i32, %arg1: i32, %arg2: i32) -> (i32, i32) {
    %c0_i32 = arith.constant 0 : i32
    %c0_i32_0 = arith.constant 0 : i32
    return %c0_i32, %arg1 : i32, i32
  }
  func.func @transform_8(%arg0: i32, %arg1: i32, %arg2: i32) -> (i32, i32) {
    %c0_i32 = arith.constant 0 : i32
    return %arg0, %arg1 : i32, i32
  }
}

</mosaic_0001>

<llo_original>
// kernel: tpu_custom_call.1
$region0: #{tpu_custom_call.1}
  #allocation0 [shape = 'u32[]', space=smem, size = 0x4, offset = 0x4, fixed_abs, tag = 'smem constant byte address 0x4 - core index']
  #allocation1 [shape = 'u32[72,128]{1,0:T(1,128)}', space=vmem, size = 0x9000, scoped, tag = 'internal scratch']
  #allocation2 [shape = 'f32[8,128]{1,0:T(8,128)}', space=vmem, size = 0x1000, scoped, tag = 'scratch operand']
  %s0 = inlined_call_operand.hbm [shape: f32[8,128], index: 0, kind: input, shape index: {}]
  %s1 = inlined_call_operand.hbm [shape: f32[1,128], index: 1, kind: input, shape index: {}]
  %s2 = inlined_call_operand.hbm [shape: f32[128,128], index: 2, kind: input, shape index: {}]
  %s3 = inlined_call_operand.hbm [shape: f32[128,128], index: 3, kind: input, shape index: {}]
  %s4 = inlined_call_operand.vmem [shape: f32[1,128], index: 4, kind: input, shape index: {}]
  %s5 = inlined_call_operand.vmem [shape: f32[1,128], index: 5, kind: input, shape index: {}]
  %s6 = inlined_call_operand.vmem [shape: f32[1,128], index: 6, kind: input, shape index: {}]
  %s7 = inlined_call_operand.vmem [shape: f32[1,128], index: 7, kind: input, shape index: {}]
  %s8 = inlined_call_operand.hbm [shape: f32[8,128], index: 8, kind: output, shape index: {}]
  %s9 = sld [smem:[#allocation0]]
  $region66: #{tpu_custom_call.1} parent=0
    _
  %s11 = ssub.s32 1, %s9
  %s12 = scalar_select 0, %s11, %s9
  $region1: #{tpu_custom_call.1} parent=0
    #allocation3 [shape = 'u8[4096]{0}', space=vmem, size = 0x1000, scoped, tag = 'input window, operand 0, single buffered']
    #allocation4 [shape = 's32[1]{0}', space=sflag, size = 0x4, scoped, tag = 'scoped memory for tpu_custom_call.1']
    #allocation5 [shape = 's32[1]{0}', space=sflag, size = 0x4, scoped, tag = 'scoped memory for tpu_custom_call.1']
    #allocation6 [shape = 'u8[512]{0}', space=vmem, size = 0x400, scoped, tag = 'input window, operand 1, single buffered']
    #allocation7 [shape = 's32[1]{0}', space=sflag, size = 0x4, scoped, tag = 'scoped memory for tpu_custom_call.1']
    #allocation8 [shape = 'u8[65536]{0}', space=vmem, size = 0x10000, scoped, tag = 'input window, operand 2, single buffered']
    #allocation9 [shape = 'u8[65536]{0}', space=vmem, size = 0x10000, scoped, tag = 'input window, operand 3, single buffered']
    #allocation10 [shape = 's32[1]{0}', space=sflag, size = 0x4, scoped, tag = 'scoped memory for tpu_custom_call.1']
    #allocation11 [shape = 'u8[4096]{0}', space=vmem, size = 0x1000, scoped, tag = 'output window, operand 0, single buffered']
    %13 = vsyncpa [#allocation4], 0
    %14 = vsyncpa [#allocation7], 0
    %15 = vsyncpa [#allocation10], 0
    %16 = vsyncpa [#allocation5], 0
    // Predicated region
    $region2: #{tpu_custom_call.1} parent=1 // pred_check
      _
    $region3: #{tpu_custom_call.1} parent=1 // pred_check_branch
      %18 = sbr.rel (0) target = $region5
    $region4: #{tpu_custom_call.1} parent=1 // pred_region
      %20 = vsyncadd [#allocation4], 0
      %s22 = sshll.u32 %s0, 4
      %s23 = int_to_ptr.hbm [resolvable:$true] %s22
      %s24 = sshll.u32 [#allocation3], 4
      %s25 = int_to_ptr.vmem [resolvable:$true] %s24
      %27 = dma.hbm_to_vmem [thread:$0]  %s23, 128, %s25, [#allocation4]
    $region5: #{tpu_custom_call.1} parent=1 // pred_fallthru
      _
    // Predicated region
    $region6: #{tpu_custom_call.1} parent=1 // pred_check
      _
    $region7: #{tpu_custom_call.1} parent=1 // pred_check_branch
      %29 = sbr.rel (0) target = $region9
    $region8: #{tpu_custom_call.1} parent=1 // pred_region
      %31 = vsyncadd [#allocation7], 0
      %s33 = sshll.u32 %s1, 4
      %s34 = int_to_ptr.hbm [resolvable:$true] %s33
      %s35 = sshll.u32 [#allocation6], 4
      %s36 = int_to_ptr.vmem [resolvable:$true] %s35
      %38 = dma.hbm_to_vmem [thread:$0]  %s34, 16, %s36, [#allocation7]
    $region9: #{tpu_custom_call.1} parent=1 // pred_fallthru
      _
    // Predicated region
    $region10: #{tpu_custom_call.1} parent=1 // pred_check
      _
    $region11: #{tpu_custom_call.1} parent=1 // pred_check_branch
      %40 = sbr.rel (0) target = $region13
    $region12: #{tpu_custom_call.1} parent=1 // pred_region
      %42 = vsyncadd [#allocation7], 0
      %s43 = sshll.u32 %s2, 4
      %s44 = int_to_ptr.hbm [resolvable:$true] %s43
      %s45 = sshll.u32 [#allocation8], 4
      %s46 = int_to_ptr.vmem [resolvable:$true] %s45
      %51 = dma.hbm_to_vmem [thread:$0]  %s44, 2048, %s46, [#allocation7], 128, 128, 8
    $region13: #{tpu_custom_call.1} parent=1 // pred_fallthru
      _
    // Predicated region
    $region14: #{tpu_custom_call.1} parent=1 // pred_check
      _
    $region15: #{tpu_custom_call.1} parent=1 // pred_check_branch
      %53 = sbr.rel (0) target = $region17
    $region16: #{tpu_custom_call.1} parent=1 // pred_region
      %55 = vsyncadd [#allocation10], 0
      %s56 = sshll.u32 %s3, 4
      %s57 = int_to_ptr.hbm [resolvable:$true] %s56
      %s58 = sshll.u32 [#allocation9], 4
      %s59 = int_to_ptr.vmem [resolvable:$true] %s58
      %64 = dma.hbm_to_vmem [thread:$0]  %s57, 2048, %s59, [#allocation10], 128, 128, 8
    $region17: #{tpu_custom_call.1} parent=1 // pred_fallthru
      _
    // Predicated region
    $region18: #{tpu_custom_call.1} parent=1 // pred_check
      _
    $region19: #{tpu_custom_call.1} parent=1 // pred_check_branch
      %66 = sbr.rel (0) target = $region21
    $region20: #{tpu_custom_call.1} parent=1 // pred_region
      _
    $region21: #{tpu_custom_call.1} parent=1 // pred_fallthru
      _
    // Predicated region
    $region22: #{tpu_custom_call.1} parent=1 // pred_check
      _
    $region23: #{tpu_custom_call.1} parent=1 // pred_check_branch
      %68 = sbr.rel (0) target = $region25
    $region24: #{tpu_custom_call.1} parent=1 // pred_region
      _
    $region25: #{tpu_custom_call.1} parent=1 // pred_fallthru
      _
    // Predicated region
    $region26: #{tpu_custom_call.1} parent=1 // pred_check
      _
    $region27: #{tpu_custom_call.1} parent=1 // pred_check_branch
      %70 = sbr.rel (0) target = $region29
    $region28: #{tpu_custom_call.1} parent=1 // pred_region
      _
    $region29: #{tpu_custom_call.1} parent=1 // pred_fallthru
      _
    // Predicated region
    $region30: #{tpu_custom_call.1} parent=1 // pred_check
      _
    $region31: #{tpu_custom_call.1} parent=1 // pred_check_branch
      %72 = sbr.rel (0) target = $region33
    $region32: #{tpu_custom_call.1} parent=1 // pred_region
      _
    $region33: #{tpu_custom_call.1} parent=1 // pred_fallthru
      _
    // Predicated region
    $region34: #{tpu_custom_call.1} parent=1 // pred_check
      _
    $region35: #{tpu_custom_call.1} parent=1 // pred_check_branch
      %74 = sbr.rel (0) target = $region37
    $region36: #{tpu_custom_call.1} parent=1 // pred_region
      %76 = dma.done [#allocation4], 128
    $region37: #{tpu_custom_call.1} parent=1 // pred_fallthru
      _
    // Predicated region
    $region38: #{tpu_custom_call.1} parent=1 // pred_check
      _
    $region39: #{tpu_custom_call.1} parent=1 // pred_check_branch
      %78 = sbr.rel (0) target = $region41
    $region40: #{tpu_custom_call.1} parent=1 // pred_region
      %80 = dma.done [#allocation7], 16
    $region41: #{tpu_custom_call.1} parent=1 // pred_fallthru
      _
    // Predicated region
    $region42: #{tpu_custom_call.1} parent=1 // pred_check
      _
    $region43: #{tpu_custom_call.1} parent=1 // pred_check_branch
      %82 = sbr.rel (0) target = $region45
    $region44: #{tpu_custom_call.1} parent=1 // pred_region
      %84 = dma.done [#allocation7], 2048
    $region45: #{tpu_custom_call.1} parent=1 // pred_fallthru
      _
    // Predicated region
    $region46: #{tpu_custom_call.1} parent=1 // pred_check
      _
    $region47: #{tpu_custom_call.1} parent=1 // pred_check_branch
      %86 = sbr.rel (0) target = $region49
    $region48: #{tpu_custom_call.1} parent=1 // pred_region
      %88 = dma.done [#allocation10], 2048
    $region49: #{tpu_custom_call.1} parent=1 // pred_fallthru
      _
    %p89 = scmp.eq.s32.totalorder 0, 0
    // Predicated region
    $region50: #{tpu_custom_call.1} parent=1 // pred_check
      %p90 = pneg %p89
    $region51: #{tpu_custom_call.1} parent=1 // pred_check_branch
      %92 = sbr.rel (%p90) target = $region53
    $region52: #{tpu_custom_call.1} parent=1 // pred_region
      %93 = vst [vmem:[#allocation2] sm:$0xff] 0.0
    $region53: #{tpu_custom_call.1} parent=1 // pred_fallthru
      _
    %v94 = vld [vmem:[#allocation3] sm:$0xff]
    %v95 = vld [vmem:[#allocation8] sm:$0xff]
    %v96 = vld [vmem:[#allocation8 + $0x8] sm:$0xff]
    %v97 = vld [vmem:[#allocation8 + $0x10] sm:$0xff]
    %v98 = vld [vmem:[#allocation8 + $0x18] sm:$0xff]
    %v99 = vld [vmem:[#allocation8 + $0x20] sm:$0xff]
    %v100 = vld [vmem:[#allocation8 + $0x28] sm:$0xff]
    %v101 = vld [vmem:[#allocation8 + $0x30] sm:$0xff]
    %v102 = vld [vmem:[#allocation8 + $0x38] sm:$0xff]
    %v103 = vld [vmem:[#allocation8 + $0x40] sm:$0xff]
    %v104 = vld [vmem:[#allocation8 + $0x48] sm:$0xff]
    %v105 = vld [vmem:[#allocation8 + $0x50] sm:$0xff]
    %v106 = vld [vmem:[#allocation8 + $0x58] sm:$0xff]
    %v107 = vld [vmem:[#allocation8 + $0x60] sm:$0xff]
    %v108 = vld [vmem:[#allocation8 + $0x68] sm:$0xff]
    %v109 = vld [vmem:[#allocation8 + $0x70] sm:$0xff]
    %v110 = vld [vmem:[#allocation8 + $0x78] sm:$0xff]
    %v111 = vld [vmem:[#allocation6] sm:$0x1]
    %v113 = vperm.slane %v111, 0
    %v115 = vmul.f32 %v94, %v113
    %v116 = vld [vmem:[#allocation9] sm:$0xff]
    %v117 = vld [vmem:[#allocation9 + $0x8] sm:$0xff]
    %v118 = vld [vmem:[#allocation9 + $0x10] sm:$0xff]
    %v119 = vld [vmem:[#allocation9 + $0x18] sm:$0xff]
    %v120 = vld [vmem:[#allocation9 + $0x20] sm:$0xff]
    %v121 = vld [vmem:[#allocation9 + $0x28] sm:$0xff]
    %v122 = vld [vmem:[#allocation9 + $0x30] sm:$0xff]
    %v123 = vld [vmem:[#allocation9 + $0x38] sm:$0xff]
    %v124 = vld [vmem:[#allocation9 + $0x40] sm:$0xff]
    %v125 = vld [vmem:[#allocation9 + $0x48] sm:$0xff]
    %v126 = vld [vmem:[#allocation9 + $0x50] sm:$0xff]
    %v127 = vld [vmem:[#allocation9 + $0x58] sm:$0xff]
    %v128 = vld [vmem:[#allocation9 + $0x60] sm:$0xff]
    %v129 = vld [vmem:[#allocation9 + $0x68] sm:$0xff]
    %v130 = vld [vmem:[#allocation9 + $0x70] sm:$0xff]
    %v131 = vld [vmem:[#allocation9 + $0x78] sm:$0xff]
    %132 = vmatpush.xpose.msra.mxu0 %v131
    %133 = vmatpush.xpose.msra.mxu0 %v130
    %134 = vmatpush.xpose.msra.mxu0 %v129
    %135 = vmatpush.xpose.msra.mxu0 %v128
    %136 = vmatpush.xpose.msra.mxu0 %v127
    %137 = vmatpush.xpose.msra.mxu0 %v126
    %138 = vmatpush.xpose.msra.mxu0 %v125
    %139 = vmatpush.xpose.msra.mxu0 %v124
    %140 = vmatpush.xpose.msra.mxu0 %v123
    %141 = vmatpush.xpose.msra.mxu0 %v122
    %142 = vmatpush.xpose.msra.mxu0 %v121
    %143 = vmatpush.xpose.msra.mxu0 %v120
    %144 = vmatpush.xpose.msra.mxu0 %v119
    %145 = vmatpush.xpose.msra.mxu0 %v118
    %146 = vmatpush.xpose.msra.mxu0 %v117
    %147 = vmatpush.xpose.msra.mxu0 %v116
    %148 = vmatmul.f32.gmra.mxu0 %v115
    %v149 = vpop.f32.mrf.mxu0
    %v150 = vadd.f32 0.0, %v149
    %151 = vdwg.mxu0
    %v152 = vld [vmem:[%s4] sm:$0x1]
    %v154 = vperm.slane %v152, 0
    %v156 = vmul.f32 %v150, %v154
    %157 = vmatpush.xpose.msra.mxu0 %v110
    %158 = vmatpush.xpose.msra.mxu0 %v109
    %159 = vmatpush.xpose.msra.mxu0 %v108
    %160 = vmatpush.xpose.msra.mxu0 %v107
    %161 = vmatpush.xpose.msra.mxu0 %v106
    %162 = vmatpush.xpose.msra.mxu0 %v105
    %163 = vmatpush.xpose.msra.mxu0 %v104
    %164 = vmatpush.xpose.msra.mxu0 %v103
    %165 = vmatpush.xpose.msra.mxu0 %v102
    %166 = vmatpush.xpose.msra.mxu0 %v101
    %167 = vmatpush.xpose.msra.mxu0 %v100
    %168 = vmatpush.xpose.msra.mxu0 %v99
    %169 = vmatpush.xpose.msra.mxu0 %v98
    %170 = vmatpush.xpose.msra.mxu0 %v97
    %171 = vmatpush.xpose.msra.mxu0 %v96
    %172 = vmatpush.xpose.msra.mxu0 %v95
    %173 = vmatmul.f32.gmra.mxu0 %v94
    %v174 = vpop.f32.mrf.mxu0
    %v175 = vadd.f32 %v156, %v174
    %176 = vdwg.mxu0
    %v177 = vld [vmem:[#allocation2] sm:$0xff]
    %v178 = vadd.f32 %v177, %v175
    %179 = vst [vmem:[#allocation2] sm:$0xff] %v178
    // Predicated region
    $region54: #{tpu_custom_call.1} parent=1 // pred_check
      %p180 = pneg %p89
    $region55: #{tpu_custom_call.1} parent=1 // pred_check_branch
      %182 = sbr.rel (%p180) target = $region57
    $region56: #{tpu_custom_call.1} parent=1 // pred_region
      %v183 = vld [vmem:[%s5] sm:$0x1]
      %v184 = vld [vmem:[%s6] sm:$0x1]
      %v185 = vld [vmem:[%s7] sm:$0x1]
      %v186 = vmul.f32 %v184, %v185
      %v187 = vadd.f32 %v183, %v186
      %v188 = vld [vmem:[#allocation2] sm:$0xff]
      %v190 = vperm.slane %v187, 0
      %v192 = vadd.f32 %v188, %v190
      %193 = vst [vmem:[#allocation11] sm:$0xff] %v192
    $region57: #{tpu_custom_call.1} parent=1 // pred_fallthru
      _
    // Predicated region
    $region58: #{tpu_custom_call.1} parent=1 // pred_check
      _
    $region59: #{tpu_custom_call.1} parent=1 // pred_check_branch
      %195 = sbr.rel (0) target = $region61
    $region60: #{tpu_custom_call.1} parent=1 // pred_region
      %197 = vsyncadd [#allocation5], 0
      %s199 = sshll.u32 [#allocation11], 4
      %s200 = int_to_ptr.vmem [resolvable:$true] %s199
      %s201 = sshll.u32 %s8, 4
      %s202 = int_to_ptr.hbm [resolvable:$true] %s201
      %204 = dma.vmem_to_hbm [thread:$0]  %s200, 128, %s202, [#allocation5]
    $region61: #{tpu_custom_call.1} parent=1 // pred_fallthru
      _
    // Predicated region
    $region62: #{tpu_custom_call.1} parent=1 // pred_check
      _
    $region63: #{tpu_custom_call.1} parent=1 // pred_check_branch
      %206 = sbr.rel (0) target = $region65
    $region64: #{tpu_custom_call.1} parent=1 // pred_region
      %208 = dma.done [#allocation5], 128
    $region65: #{tpu_custom_call.1} parent=1 // pred_fallthru
      _
    %209 = vsyncpa [#allocation4], 1
    %210 = vsyncpa [#allocation7], 1
    %211 = vsyncpa [#allocation10], 1
    %212 = vsyncpa [#allocation5], 1

</llo_original>
